<compile_context>
chip_gen: v7x
topology: tpu7x:2x2x1
jax: 0.10.0
libtpu: 0.0.40
codegen_flags: <defaults>
</compile_context>

<pallas_src>
import math
from functools import partial

import jax
import jax.numpy as jnp
from jax import lax
from jax.experimental import pallas as pl
from jax.experimental.pallas import tpu as pltpu

EPS = 1e-5  # torch BatchNorm2d default eps


# ----------------------------- Pallas kernel -----------------------------

def _tdf_kernel(xT_ref, w1_ref, s1_ref, b1_ref, w2_ref, s2_ref, b2_ref, o_ref):
    """Fused TDF bottleneck MLP, transposed layout.

    xT_ref: (F, TM)  input columns (one column per (b, c, t) row of the NCHW input)
    w1_ref: (U, F)   first Linear weight (as stored by torch: out x in)
    s1/b1:  (1, TM)  folded BN1 per-column scale/shift (per-channel, broadcast over b, t)
    w2_ref: (F, U)   second Linear weight
    s2/b2:  (1, TM)  folded BN2 per-column scale/shift
    o_ref:  (F, TM)  output columns (lane-dense store)
    """
    x = xT_ref[...]                                                    # (F, TM)
    h = jnp.dot(w1_ref[...], x, preferred_element_type=jnp.float32)   # (U, TM)
    h = jnp.maximum(h * s1_ref[...] + b1_ref[...], 0.0)               # BN1 + ReLU
    v = jnp.dot(w2_ref[...], h, preferred_element_type=jnp.float32)   # (F, TM)
    v = jnp.maximum(v * s2_ref[...] + b2_ref[...], 0.0)               # BN2 + ReLU
    o_ref[...] = v.astype(o_ref.dtype)


# ----------------------------- wrapper -----------------------------

def tdf_forward(x, kp):
    """x: (B, C, T, F) float32 -> (B, C, T, F) float32."""
    B, C, T, F = x.shape
    M = B * C * T
    W1, W2 = kp["w1"], kp["w2"]                    # (U, F), (F, U)
    U = W1.shape[0]

    # per-channel folded BN -> per-column (1, M) rows, column order = (b, c, t)
    def cols(v):                                   # v: (C,)
        return jnp.broadcast_to(v[None, :, None], (B, C, T)).reshape(1, M)

    s1, b1 = cols(kp["scale1"]), cols(kp["shift1"])
    s2, b2 = cols(kp["scale2"]), cols(kp["shift2"])

    # lane-dense presentation: columns = B*C*T (layout plumbing done in the wrapper)
    xT = x.reshape(M, F).T                         # (F, M)

    # tile the lane axis; one 128-wide tile covers the whole toy batch
    TM = 128 if M % 128 == 0 else M
    grid = (M // TM,)

    out_t = pl.pallas_call(
        _tdf_kernel,
        out_shape=jax.ShapeDtypeStruct((F, M), jnp.float32),
        grid=grid,
        in_specs=[
            pl.BlockSpec((F, TM), lambda i: (0, i)),
            pl.BlockSpec((U, F), lambda i: (0, 0)),
            pl.BlockSpec((1, TM), lambda i: (0, i)),
            pl.BlockSpec((1, TM), lambda i: (0, i)),
            pl.BlockSpec((F, U), lambda i: (0, 0)),
            pl.BlockSpec((1, TM), lambda i: (0, i)),
            pl.BlockSpec((1, TM), lambda i: (0, i)),
        ],
        out_specs=pl.BlockSpec((F, TM), lambda i: (0, i)),
        compiler_params=pltpu.CompilerParams(
            dimension_semantics=("parallel",)),    # shards tiles across v7x cores
    )(xT, W1, s1, b1, W2, s2, b2)

    return out_t.T.reshape(B, C, T, F)


# ----------------------------- parameters -----------------------------

def build_params(key, *, channels, f, bn_units):
    def bn_params(k, ch):
        k1, k2, k3, k4 = jax.random.split(k, 4)
        gamma = 1.0 + 0.1 * jax.random.normal(k1, (ch,), jnp.float32)
        beta = 0.1 * jax.random.normal(k2, (ch,), jnp.float32)
        mean = 0.1 * jax.random.normal(k3, (ch,), jnp.float32)
        var = 0.5 + 0.2 * jnp.abs(jax.random.normal(k4, (ch,), jnp.float32))
        return gamma, beta, mean, var

    def fold(bnp):
        gamma, beta, mean, var = bnp
        scale = gamma / jnp.sqrt(var + EPS)
        return scale, beta - mean * scale

    k1, k2, k3, k4 = jax.random.split(key, 4)
    W1 = 0.2 * jax.random.normal(k1, (bn_units, f), jnp.float32)   # Linear(f, U), bias=False
    W2 = 0.2 * jax.random.normal(k2, (f, bn_units), jnp.float32)   # Linear(U, f), bias=False
    bn1 = bn_params(k3, channels)
    bn2 = bn_params(k4, channels)

    raw = dict(W1=W1, W2=W2, bn1=bn1, bn2=bn2)
    s1, b1 = fold(bn1)
    s2, b2 = fold(bn2)
    kp = dict(w1=W1, w2=W2, scale1=s1, shift1=b1, scale2=s2, shift2=b2)
    return raw, kp


# ----------------------------- pure-JAX reference -----------------------------

def reference_forward(x, raw):
    def bn(y, p):
        gamma, beta, mean, var = p
        sh = (1, -1, 1, 1)
        return ((y - mean.reshape(sh)) / jnp.sqrt(var.reshape(sh) + EPS)
                * gamma.reshape(sh) + beta.reshape(sh))

    h = jnp.einsum("bctf,uf->bctu", x, raw["W1"], precision=lax.Precision.HIGHEST)
    h = jnp.maximum(bn(h, raw["bn1"]), 0.0)
    v = jnp.einsum("bctu,fu->bctf", h, raw["W2"], precision=lax.Precision.HIGHEST)
    return jnp.maximum(bn(v, raw["bn2"]), 0.0)


# ----------------------------- main -----------------------------

if __name__ == "__main__":
    # TDF(channels=4, f=16, bn_factor=16, min_bn_units=16) on x: [2, 4, 16, 16]
    B, C, T, F = 2, 4, 16, 16
    bn_factor, min_bn_units = 16, 16
    bn_units = max(F // bn_factor, min_bn_units)   # = 16

    kx, kparams = jax.random.split(jax.random.PRNGKey(0), 2)
    x = jax.random.normal(kx, (B, C, T, F), jnp.float32)

    raw, kp = build_params(kparams, channels=C, f=F, bn_units=bn_units)

    out = tdf_forward(x, kp)
    out = jax.block_until_ready(out)

    ref = reference_forward(x, raw)
    assert out.shape == (B, C, T, F)
    assert jnp.allclose(out, ref, rtol=1e-3, atol=1e-3), float(jnp.max(jnp.abs(out - ref)))

    # TODO(synk): bn_factor=None (single Linear) variant and norm='gn' (GroupNorm) branch
    # are not exercised by the default config and are not implemented.
    # TODO(synk): BatchNorm is folded in inference mode; training-mode batch statistics
    # are not computed in-kernel.
    print("KERNEL_OK")
</pallas_src>

<mosaic_0001>
module attributes {stable_mosaic.version = 11 : i64} {
  func.func @_tdf_kernel(%arg0: i32, %arg1: memref<16x128xf32, #tpu.memory_space<vmem>>, %arg2: memref<16x16xf32, #tpu.memory_space<vmem>>, %arg3: memref<1x128xf32, #tpu.memory_space<vmem>>, %arg4: memref<1x128xf32, #tpu.memory_space<vmem>>, %arg5: memref<16x16xf32, #tpu.memory_space<vmem>>, %arg6: memref<1x128xf32, #tpu.memory_space<vmem>>, %arg7: memref<1x128xf32, #tpu.memory_space<vmem>>, %arg8: memref<16x128xf32, #tpu.memory_space<vmem>>) attributes {dimension_semantics = [#tpu.dimension_semantics<parallel>], iteration_bounds = array<i64: 1>, scalar_prefetch = 0 : i64, scratch_operands = 0 : i64, tpu.core_type = #tpu.core_type<tc>, window_params = [{transform_indices = @transform_0, window_bounds = array<i64: 16, 128>}, {pipeline_mode = #tpu.pipeline_mode<synchronous>, transform_indices = @transform_1, window_bounds = array<i64: 16, 16>}, {transform_indices = @transform_2, window_bounds = array<i64: 1, 128>}, {transform_indices = @transform_3, window_bounds = array<i64: 1, 128>}, {pipeline_mode = #tpu.pipeline_mode<synchronous>, transform_indices = @transform_4, window_bounds = array<i64: 16, 16>}, {transform_indices = @transform_5, window_bounds = array<i64: 1, 128>}, {transform_indices = @transform_6, window_bounds = array<i64: 1, 128>}, {transform_indices = @transform_7, window_bounds = array<i64: 16, 128>}]} {
    %c0 = arith.constant 0 : index
    %c0_0 = arith.constant 0 : index
    %0 = vector.load %arg1[%c0, %c0_0] : memref<16x128xf32, #tpu.memory_space<vmem>>, vector<16x128xf32>
    %c0_1 = arith.constant 0 : index
    %c0_2 = arith.constant 0 : index
    %1 = vector.load %arg2[%c0_1, %c0_2] : memref<16x16xf32, #tpu.memory_space<vmem>>, vector<16x16xf32>
    %cst = arith.constant dense<0.000000e+00> : vector<16x128xf32>
    %2 = tpu.matmul %1, %0, %cst {dimension_numbers = #tpu.dot_dimension_numbers<[1], [0], [0], [1], [0, 0, 1, 1], [], []>} : vector<16x16xf32>, vector<16x128xf32>, vector<16x128xf32> -> vector<16x128xf32>
    %c0_3 = arith.constant 0 : index
    %c0_4 = arith.constant 0 : index
    %3 = vector.load %arg3[%c0_3, %c0_4] : memref<1x128xf32, #tpu.memory_space<vmem>>, vector<1x128xf32>
    %4 = vector.broadcast %3 : vector<1x128xf32> to vector<16x128xf32>
    %5 = arith.mulf %2, %4 : vector<16x128xf32>
    %c0_5 = arith.constant 0 : index
    %c0_6 = arith.constant 0 : index
    %6 = vector.load %arg4[%c0_5, %c0_6] : memref<1x128xf32, #tpu.memory_space<vmem>>, vector<1x128xf32>
    %7 = vector.broadcast %6 : vector<1x128xf32> to vector<16x128xf32>
    %8 = arith.addf %5, %7 : vector<16x128xf32>
    %cst_7 = arith.constant 0.000000e+00 : f32
    %9 = vector.broadcast %cst_7 : f32 to vector<16x128xf32>
    %10 = arith.maximumf %8, %9 : vector<16x128xf32>
    %c0_8 = arith.constant 0 : index
    %c0_9 = arith.constant 0 : index
    %11 = vector.load %arg5[%c0_8, %c0_9] : memref<16x16xf32, #tpu.memory_space<vmem>>, vector<16x16xf32>
    %cst_10 = arith.constant dense<0.000000e+00> : vector<16x128xf32>
    %12 = tpu.matmul %11, %10, %cst_10 {dimension_numbers = #tpu.dot_dimension_numbers<[1], [0], [0], [1], [0, 0, 1, 1], [], []>} : vector<16x16xf32>, vector<16x128xf32>, vector<16x128xf32> -> vector<16x128xf32>
    %c0_11 = arith.constant 0 : index
    %c0_12 = arith.constant 0 : index
    %13 = vector.load %arg6[%c0_11, %c0_12] : memref<1x128xf32, #tpu.memory_space<vmem>>, vector<1x128xf32>
    %14 = vector.broadcast %13 : vector<1x128xf32> to vector<16x128xf32>
    %15 = arith.mulf %12, %14 : vector<16x128xf32>
    %c0_13 = arith.constant 0 : index
    %c0_14 = arith.constant 0 : index
    %16 = vector.load %arg7[%c0_13, %c0_14] : memref<1x128xf32, #tpu.memory_space<vmem>>, vector<1x128xf32>
    %17 = vector.broadcast %16 : vector<1x128xf32> to vector<16x128xf32>
    %18 = arith.addf %15, %17 : vector<16x128xf32>
    %cst_15 = arith.constant 0.000000e+00 : f32
    %19 = vector.broadcast %cst_15 : f32 to vector<16x128xf32>
    %20 = arith.maximumf %18, %19 : vector<16x128xf32>
    %c0_16 = arith.constant 0 : index
    %c0_17 = arith.constant 0 : index
    %21 = vector.load %arg8[%c0_16, %c0_17] : memref<16x128xf32, #tpu.memory_space<vmem>>, vector<16x128xf32>
    tpu.vector_store %arg8[%c0_16, %c0_17], %20 {strides = array<i32>} : memref<16x128xf32, #tpu.memory_space<vmem>>, vector<16x128xf32>,
    return
  }
  func.func @transform_0(%arg0: i32) -> (i32, i32) {
    %c0_i32 = arith.constant 0 : i32
    %c0_i32_0 = arith.constant 0 : i32
    return %c0_i32, %arg0 : i32, i32
  }
  func.func @transform_1(%arg0: i32) -> (i32, i32) {
    %c0_i32 = arith.constant 0 : i32
    %c0_i32_0 = arith.constant 0 : i32
    %c0_i32_1 = arith.constant 0 : i32
    return %c0_i32, %c0_i32_0 : i32, i32
  }
  func.func @transform_2(%arg0: i32) -> (i32, i32) {
    %c0_i32 = arith.constant 0 : i32
    %c0_i32_0 = arith.constant 0 : i32
    return %c0_i32, %arg0 : i32, i32
  }
  func.func @transform_3(%arg0: i32) -> (i32, i32) {
    %c0_i32 = arith.constant 0 : i32
    %c0_i32_0 = arith.constant 0 : i32
    return %c0_i32, %arg0 : i32, i32
  }
  func.func @transform_4(%arg0: i32) -> (i32, i32) {
    %c0_i32 = arith.constant 0 : i32
    %c0_i32_0 = arith.constant 0 : i32
    %c0_i32_1 = arith.constant 0 : i32
    return %c0_i32, %c0_i32_0 : i32, i32
  }
  func.func @transform_5(%arg0: i32) -> (i32, i32) {
    %c0_i32 = arith.constant 0 : i32
    %c0_i32_0 = arith.constant 0 : i32
    return %c0_i32, %arg0 : i32, i32
  }
  func.func @transform_6(%arg0: i32) -> (i32, i32) {
    %c0_i32 = arith.constant 0 : i32
    %c0_i32_0 = arith.constant 0 : i32
    return %c0_i32, %arg0 : i32, i32
  }
  func.func @transform_7(%arg0: i32) -> (i32, i32) {
    %c0_i32 = arith.constant 0 : i32
    %c0_i32_0 = arith.constant 0 : i32
    return %c0_i32, %arg0 : i32, i32
  }
}

</mosaic_0001>

<llo_original>
// kernel: tpu_custom_call.1
$region0: #{tpu_custom_call.1}
  #allocation0 [shape = 'u32[]', space=smem, size = 0x4, offset = 0x4, fixed_abs, tag = 'smem constant byte address 0x4 - core index']
  #allocation1 [shape = 'u32[144,128]{1,0:T(1,128)}', space=vmem, size = 0x12000, scoped, tag = 'internal scratch']
  %s0 = inlined_call_operand.hbm [shape: f32[16,128], index: 0, kind: input, shape index: {}]
  %s1 = inlined_call_operand.hbm [shape: f32[16,16], index: 1, kind: input, shape index: {}]
  %s2 = inlined_call_operand.vmem [shape: f32[1,128], index: 2, kind: input, shape index: {}]
  %s3 = inlined_call_operand.vmem [shape: f32[1,128], index: 3, kind: input, shape index: {}]
  %s4 = inlined_call_operand.hbm [shape: f32[16,16], index: 4, kind: input, shape index: {}]
  %s5 = inlined_call_operand.vmem [shape: f32[1,128], index: 5, kind: input, shape index: {}]
  %s6 = inlined_call_operand.vmem [shape: f32[1,128], index: 6, kind: input, shape index: {}]
  %s7 = inlined_call_operand.hbm [shape: f32[16,128], index: 7, kind: output, shape index: {}]
  %s8 = sld [smem:[#allocation0]]
  $region50: #{tpu_custom_call.1} parent=0
    _
  %s10 = ssub.s32 1, %s8
  %s11 = scalar_select 0, %s10, %s8
  $region1: #{tpu_custom_call.1} parent=0
    #allocation2 [shape = 'u8[8192]{0}', space=vmem, size = 0x2000, scoped, tag = 'input window, operand 0, single buffered']
    #allocation3 [shape = 's32[1]{0}', space=sflag, size = 0x4, scoped, tag = 'scoped memory for tpu_custom_call.1']
    #allocation4 [shape = 's32[1]{0}', space=sflag, size = 0x4, scoped, tag = 'scoped memory for tpu_custom_call.1']
    #allocation5 [shape = 'u8[8192]{0}', space=vmem, size = 0x2000, scoped, tag = 'input window, operand 1, single buffered']
    #allocation6 [shape = 's32[1]{0}', space=sflag, size = 0x4, scoped, tag = 'scoped memory for tpu_custom_call.1']
    #allocation7 [shape = 'u8[8192]{0}', space=vmem, size = 0x2000, scoped, tag = 'input window, operand 4, single buffered']
    #allocation8 [shape = 'u8[8192]{0}', space=vmem, size = 0x2000, scoped, tag = 'output window, operand 0, single buffered']
    %12 = vsyncpa [#allocation3], 0
    %13 = vsyncpa [#allocation6], 0
    %14 = vsyncpa [#allocation4], 0
    // Predicated region
    $region2: #{tpu_custom_call.1} parent=1 // pred_check
      _
    $region3: #{tpu_custom_call.1} parent=1 // pred_check_branch
      %16 = sbr.rel (0) target = $region5
    $region4: #{tpu_custom_call.1} parent=1 // pred_region
      %s18 = ssub.s32 256, 256
      %19 = vsyncadd [#allocation3], %s18
      %s20 = sshll.u32 [#allocation2], 4
      %s21 = int_to_ptr.vmem [resolvable:$true] %s20
      %26 = dma.hbm_to_vmem [thread:$0]  %s0, 256, %s21, [#allocation3], 128, 128, 8
    $region5: #{tpu_custom_call.1} parent=1 // pred_fallthru
      _
    // Predicated region
    $region6: #{tpu_custom_call.1} parent=1 // pred_check
      _
    $region7: #{tpu_custom_call.1} parent=1 // pred_check_branch
      %28 = sbr.rel (0) target = $region9
    $region8: #{tpu_custom_call.1} parent=1 // pred_region
      %s30 = ssub.s32 256, 256
      %31 = vsyncadd [#allocation6], %s30
      %s32 = sshll.u32 [#allocation5], 4
      %s33 = int_to_ptr.vmem [resolvable:$true] %s32
      %38 = dma.hbm_to_vmem [thread:$0]  %s1, 256, %s33, [#allocation6], 128, 128, 8
    $region9: #{tpu_custom_call.1} parent=1 // pred_fallthru
      _
    // Predicated region
    $region10: #{tpu_custom_call.1} parent=1 // pred_check
      _
    $region11: #{tpu_custom_call.1} parent=1 // pred_check_branch
      %40 = sbr.rel (0) target = $region13
    $region12: #{tpu_custom_call.1} parent=1 // pred_region
      _
    $region13: #{tpu_custom_call.1} parent=1 // pred_fallthru
      _
    // Predicated region
    $region14: #{tpu_custom_call.1} parent=1 // pred_check
      _
    $region15: #{tpu_custom_call.1} parent=1 // pred_check_branch
      %42 = sbr.rel (0) target = $region17
    $region16: #{tpu_custom_call.1} parent=1 // pred_region
      _
    $region17: #{tpu_custom_call.1} parent=1 // pred_fallthru
      _
    // Predicated region
    $region18: #{tpu_custom_call.1} parent=1 // pred_check
      _
    $region19: #{tpu_custom_call.1} parent=1 // pred_check_branch
      %44 = sbr.rel (0) target = $region21
    $region20: #{tpu_custom_call.1} parent=1 // pred_region
      %s46 = ssub.s32 256, 256
      %47 = vsyncadd [#allocation6], %s46
      %s48 = sshll.u32 [#allocation7], 4
      %s49 = int_to_ptr.vmem [resolvable:$true] %s48
      %54 = dma.hbm_to_vmem [thread:$0]  %s4, 256, %s49, [#allocation6], 128, 128, 8
    $region21: #{tpu_custom_call.1} parent=1 // pred_fallthru
      _
    // Predicated region
    $region22: #{tpu_custom_call.1} parent=1 // pred_check
      _
    $region23: #{tpu_custom_call.1} parent=1 // pred_check_branch
      %56 = sbr.rel (0) target = $region25
    $region24: #{tpu_custom_call.1} parent=1 // pred_region
      _
    $region25: #{tpu_custom_call.1} parent=1 // pred_fallthru
      _
    // Predicated region
    $region26: #{tpu_custom_call.1} parent=1 // pred_check
      _
    $region27: #{tpu_custom_call.1} parent=1 // pred_check_branch
      %58 = sbr.rel (0) target = $region29
    $region28: #{tpu_custom_call.1} parent=1 // pred_region
      _
    $region29: #{tpu_custom_call.1} parent=1 // pred_fallthru
      _
    // Predicated region
    $region30: #{tpu_custom_call.1} parent=1 // pred_check
      _
    $region31: #{tpu_custom_call.1} parent=1 // pred_check_branch
      %60 = sbr.rel (0) target = $region33
    $region32: #{tpu_custom_call.1} parent=1 // pred_region
      %61 = dma.done [#allocation3], 256
    $region33: #{tpu_custom_call.1} parent=1 // pred_fallthru
      _
    // Predicated region
    $region34: #{tpu_custom_call.1} parent=1 // pred_check
      _
    $region35: #{tpu_custom_call.1} parent=1 // pred_check_branch
      %63 = sbr.rel (0) target = $region37
    $region36: #{tpu_custom_call.1} parent=1 // pred_region
      %64 = dma.done [#allocation6], 256
    $region37: #{tpu_custom_call.1} parent=1 // pred_fallthru
      _
    // Predicated region
    $region38: #{tpu_custom_call.1} parent=1 // pred_check
      _
    $region39: #{tpu_custom_call.1} parent=1 // pred_check_branch
      %66 = sbr.rel (0) target = $region41
    $region40: #{tpu_custom_call.1} parent=1 // pred_region
      %67 = dma.done [#allocation6], 256
    $region41: #{tpu_custom_call.1} parent=1 // pred_fallthru
      _
    %v68 = vld [vmem:[#allocation2] sm:$0xff]
    %v69 = vld [vmem:[#allocation2 + $0x8] sm:$0xff]
    %v70 = vld [vmem:[#allocation5] sm:$0xff]
    %v71 = vld [vmem:[#allocation5 + $0x8] sm:$0xff]
    %vm72 = vcmask 130048
    %v74 = vsel %vm72, %v70, 0
    %v77 = vsel %vm72, %v71, 0
    %79 = vmatprep.subr.mxu0 0.0
    %80 = vmatpush1.msra.mxu0 %v68
    %81 = vmatprep.subr.mxu0 0.0
    %82 = vmatpush1.msra.mxu0 %v69
    %83 = vmatprep.subr.mxu0 0.0
    %84 = vmatpush1.msra.mxu0 0.0
    %85 = vmatprep.subr.mxu0 0.0
    %86 = vmatpush1.msra.mxu0 0.0
    %87 = vmatprep.subr.mxu0 0.0
    %88 = vmatpush1.msra.mxu0 0.0
    %89 = vmatprep.subr.mxu0 0.0
    %90 = vmatpush1.msra.mxu0 0.0
    %91 = vmatprep.subr.mxu0 0.0
    %92 = vmatpush1.msra.mxu0 0.0
    %93 = vmatprep.subr.mxu0 0.0
    %94 = vmatpush1.msra.mxu0 0.0
    %95 = vmatprep.subr.mxu0 0.0
    %96 = vmatpush1.msra.mxu0 0.0
    %97 = vmatprep.subr.mxu0 0.0
    %98 = vmatpush1.msra.mxu0 0.0
    %99 = vmatprep.subr.mxu0 0.0
    %100 = vmatpush1.msra.mxu0 0.0
    %101 = vmatprep.subr.mxu0 0.0
    %102 = vmatpush1.msra.mxu0 0.0
    %103 = vmatprep.subr.mxu0 0.0
    %104 = vmatpush1.msra.mxu0 0.0
    %105 = vmatprep.subr.mxu0 0.0
    %106 = vmatpush1.msra.mxu0 0.0
    %107 = vmatprep.subr.mxu0 0.0
    %108 = vmatpush1.msra.mxu0 0.0
    %109 = vmatprep.subr.mxu0 0.0
    %110 = vmatpush1.msra.mxu0 0.0
    %111 = vmatprep.subr.mxu0 0.0
    %112 = vmatpush1.msra.mxu0 0.0
    %113 = vmatprep.subr.mxu0 0.0
    %114 = vmatpush1.msra.mxu0 0.0
    %115 = vmatprep.subr.mxu0 0.0
    %116 = vmatpush1.msra.mxu0 0.0
    %117 = vmatprep.subr.mxu0 0.0
    %118 = vmatpush1.msra.mxu0 0.0
    %119 = vmatprep.subr.mxu0 0.0
    %120 = vmatpush1.msra.mxu0 0.0
    %121 = vmatprep.subr.mxu0 0.0
    %122 = vmatpush1.msra.mxu0 0.0
    %123 = vmatprep.subr.mxu0 0.0
    %124 = vmatpush1.msra.mxu0 0.0
    %125 = vmatprep.subr.mxu0 0.0
    %126 = vmatpush1.msra.mxu0 0.0
    %127 = vmatprep.subr.mxu0 0.0
    %128 = vmatpush1.msra.mxu0 0.0
    %129 = vmatprep.subr.mxu0 0.0
    %130 = vmatpush1.msra.mxu0 0.0
    %131 = vmatprep.subr.mxu0 0.0
    %132 = vmatpush1.msra.mxu0 0.0
    %133 = vmatprep.subr.mxu0 0.0
    %134 = vmatpush1.msra.mxu0 0.0
    %135 = vmatprep.subr.mxu0 0.0
    %136 = vmatpush1.msra.mxu0 0.0
    %137 = vmatprep.subr.mxu0 0.0
    %138 = vmatpush1.msra.mxu0 0.0
    %139 = vmatprep.subr.mxu0 0.0
    %140 = vmatpush1.msra.mxu0 0.0
    %141 = vmatprep.subr.mxu0 0.0
    %142 = vmatpush1.msra.mxu0 0.0
    %143 = vmatprep.mubr.f32.mxu0 0.0
    %144 = vmatmul.mubr.f32.gmra.mrb[0].mxu0 %v74
    %v145 = vpop.f32.mrb[0].mxu0
    %v146 = vadd.f32 0.0, %v145
    %v147 = vpop.f32.mrb[0].mxu0
    %148 = vmatprep.mubr.f32.mxu0 0.0
    %149 = vmatmul.mubr.f32.gmra.mrb[0].mxu0 %v77
    %v150 = vpop.f32.mrb[0].mxu0
    %v151 = vadd.f32 0.0, %v150
    %v152 = vpop.f32.mrb[0].mxu0
    %153 = vdwg.mxu0
    %v154 = vld [vmem:[%s2] sm:$0x1]
    %v156 = vlaneseq
    %v157 = vshrl.u32 %v156, 7
    %v158 = vsub.s32 0, %v157
    %v159 = vrot.slane %v154, %v158
    %v161 = vmul.f32 %v146, %v159
    %v162 = vmul.f32 %v151, %v159
    %v163 = vld [vmem:[%s3] sm:$0x1]
    %v165 = vlaneseq
    %v166 = vshrl.u32 %v165, 7
    %v167 = vsub.s32 0, %v166
    %v168 = vrot.slane %v163, %v167
    %v170 = vadd.f32 %v161, %v168
    %v171 = vadd.f32 %v162, %v168
    %v172 = vmax.f32 %v170, 0.0
    %v173 = vmax.f32 %v171, 0.0
    %v174 = vld [vmem:[#allocation7] sm:$0xff]
    %v175 = vld [vmem:[#allocation7 + $0x8] sm:$0xff]
    %v177 = vsel %vm72, %v174, 0
    %v180 = vsel %vm72, %v175, 0
    %182 = vmatprep.subr.mxu0 0.0
    %183 = vmatpush1.msra.mxu0 %v172
    %184 = vmatprep.subr.mxu0 0.0
    %185 = vmatpush1.msra.mxu0 %v173
    %186 = vmatprep.subr.mxu0 0.0
    %187 = vmatpush1.msra.mxu0 0.0
    %188 = vmatprep.subr.mxu0 0.0
    %189 = vmatpush1.msra.mxu0 0.0
    %190 = vmatprep.subr.mxu0 0.0
    %191 = vmatpush1.msra.mxu0 0.0
    %192 = vmatprep.subr.mxu0 0.0
    %193 = vmatpush1.msra.mxu0 0.0
    %194 = vmatprep.subr.mxu0 0.0
    %195 = vmatpush1.msra.mxu0 0.0
    %196 = vmatprep.subr.mxu0 0.0
    %197 = vmatpush1.msra.mxu0 0.0
    %198 = vmatprep.subr.mxu0 0.0
    %199 = vmatpush1.msra.mxu0 0.0
    %200 = vmatprep.subr.mxu0 0.0
    %201 = vmatpush1.msra.mxu0 0.0
    %202 = vmatprep.subr.mxu0 0.0
    %203 = vmatpush1.msra.mxu0 0.0
    %204 = vmatprep.subr.mxu0 0.0
    %205 = vmatpush1.msra.mxu0 0.0
    %206 = vmatprep.subr.mxu0 0.0
    %207 = vmatpush1.msra.mxu0 0.0
    %208 = vmatprep.subr.mxu0 0.0
    %209 = vmatpush1.msra.mxu0 0.0
    %210 = vmatprep.subr.mxu0 0.0
    %211 = vmatpush1.msra.mxu0 0.0
    %212 = vmatprep.subr.mxu0 0.0
    %213 = vmatpush1.msra.mxu0 0.0
    %214 = vmatprep.subr.mxu0 0.0
    %215 = vmatpush1.msra.mxu0 0.0
    %216 = vmatprep.subr.mxu0 0.0
    %217 = vmatpush1.msra.mxu0 0.0
    %218 = vmatprep.subr.mxu0 0.0
    %219 = vmatpush1.msra.mxu0 0.0
    %220 = vmatprep.subr.mxu0 0.0
    %221 = vmatpush1.msra.mxu0 0.0
    %222 = vmatprep.subr.mxu0 0.0
    %223 = vmatpush1.msra.mxu0 0.0
    %224 = vmatprep.subr.mxu0 0.0
    %225 = vmatpush1.msra.mxu0 0.0
    %226 = vmatprep.subr.mxu0 0.0
    %227 = vmatpush1.msra.mxu0 0.0
    %228 = vmatprep.subr.mxu0 0.0
    %229 = vmatpush1.msra.mxu0 0.0
    %230 = vmatprep.subr.mxu0 0.0
    %231 = vmatpush1.msra.mxu0 0.0
    %232 = vmatprep.subr.mxu0 0.0
    %233 = vmatpush1.msra.mxu0 0.0
    %234 = vmatprep.subr.mxu0 0.0
    %235 = vmatpush1.msra.mxu0 0.0
    %236 = vmatprep.subr.mxu0 0.0
    %237 = vmatpush1.msra.mxu0 0.0
    %238 = vmatprep.subr.mxu0 0.0
    %239 = vmatpush1.msra.mxu0 0.0
    %240 = vmatprep.subr.mxu0 0.0
    %241 = vmatpush1.msra.mxu0 0.0
    %242 = vmatprep.subr.mxu0 0.0
    %243 = vmatpush1.msra.mxu0 0.0
    %244 = vmatprep.subr.mxu0 0.0
    %245 = vmatpush1.msra.mxu0 0.0
    %246 = vmatprep.mubr.f32.mxu0 0.0
    %247 = vmatmul.mubr.f32.gmra.mrb[0].mxu0 %v177
    %v248 = vpop.f32.mrb[0].mxu0
    %v249 = vadd.f32 0.0, %v248
    %v250 = vpop.f32.mrb[0].mxu0
    %251 = vmatprep.mubr.f32.mxu0 0.0
    %252 = vmatmul.mubr.f32.gmra.mrb[0].mxu0 %v180
    %v253 = vpop.f32.mrb[0].mxu0
    %v254 = vadd.f32 0.0, %v253
    %v255 = vpop.f32.mrb[0].mxu0
    %256 = vdwg.mxu0
    %v257 = vld [vmem:[%s5] sm:$0x1]
    %v259 = vlaneseq
    %v260 = vshrl.u32 %v259, 7
    %v261 = vsub.s32 0, %v260
    %v262 = vrot.slane %v257, %v261
    %v264 = vmul.f32 %v249, %v262
    %v265 = vmul.f32 %v254, %v262
    %v266 = vld [vmem:[%s6] sm:$0x1]
    %v268 = vlaneseq
    %v269 = vshrl.u32 %v268, 7
    %v270 = vsub.s32 0, %v269
    %v271 = vrot.slane %v266, %v270
    %v273 = vadd.f32 %v264, %v271
    %v274 = vadd.f32 %v265, %v271
    %v275 = vmax.f32 %v273, 0.0
    %v276 = vmax.f32 %v274, 0.0
    %277 = vst [vmem:[#allocation8] sm:$0xff] %v275
    %278 = vst [vmem:[#allocation8 + $0x8] sm:$0xff] %v276
    // Predicated region
    $region42: #{tpu_custom_call.1} parent=1 // pred_check
      _
    $region43: #{tpu_custom_call.1} parent=1 // pred_check_branch
      %280 = sbr.rel (0) target = $region45
    $region44: #{tpu_custom_call.1} parent=1 // pred_region
      %s282 = ssub.s32 256, 256
      %283 = vsyncadd [#allocation4], %s282
      %s284 = sshll.u32 [#allocation8], 4
      %s285 = int_to_ptr.vmem [resolvable:$true] %s284
      %290 = dma.vmem_to_hbm [thread:$0]  %s285, 256, %s7, [#allocation4], 128, 128, 8
    $region45: #{tpu_custom_call.1} parent=1 // pred_fallthru
      _
    // Predicated region
    $region46: #{tpu_custom_call.1} parent=1 // pred_check
      _
    $region47: #{tpu_custom_call.1} parent=1 // pred_check_branch
      %292 = sbr.rel (0) target = $region49
    $region48: #{tpu_custom_call.1} parent=1 // pred_region
      %293 = dma.done [#allocation4], 256
    $region49: #{tpu_custom_call.1} parent=1 // pred_fallthru
      _
    %294 = vsyncpa [#allocation3], 1
    %295 = vsyncpa [#allocation6], 1
    %296 = vsyncpa [#allocation4], 1

</llo_original>
